<compile_context>
chip_gen: v7x
topology: tpu7x:2x2x1
jax: 0.10.0
libtpu: 0.0.40
codegen_flags: <defaults>
</compile_context>

<pallas_src>
import math
import numpy as np
import jax
import jax.numpy as jnp
from jax import lax
from jax.experimental import pallas as pl
from jax.experimental.pallas import tpu as pltpu


def _round_up(a: int, b: int) -> int:
    return (a + b - 1) // b * b


def gaussian_kernel_1d(sigma: float) -> np.ndarray:
    # TODO(synk): exact `filters.gaussian_kernel` source not provided; use the
    # standard normalized Gaussian truncated at 3*sigma (separable 1D form).
    radius = max(1, int(math.ceil(3.0 * sigma)))
    ax = np.arange(-radius, radius + 1, dtype=np.float64)
    g = np.exp(-(ax ** 2) / (2.0 * sigma ** 2))
    g = g / g.sum()
    return g.astype(np.float32)


def _band_matrix(weights: np.ndarray, W: int) -> np.ndarray:
    """(W, W) banded matrix M such that `blurred = d @ M` implements the
    horizontal zero-padded tap pass (the zero padding is encoded by the band
    simply being clipped at the image edges)."""
    K = len(weights)
    r = K // 2
    m = np.zeros((W, W), dtype=np.float32)
    for dx in range(K):
        off = dx - r
        for w_out in range(W):
            w_in = w_out + off
            if 0 <= w_in < W:
                m[w_in, w_out] = float(weights[dx])
    return m


def _vmem_capacity_bytes() -> int:
    try:
        info = pltpu.get_tpu_info()
        for attr in ("vmem_capacity_bytes", "vmem_bytes", "vmem_size_bytes"):
            v = getattr(info, attr, None)
            if v:
                return int(v)
    except Exception:
        pass
    return 64 * 1024 * 1024     # conservative (v7x-sized) fallback


def _channel_mask(d, TC, N, needs_mask):
    # zero channels past N when the last channel block is partial
    if not needs_mask:
        return d
    ch = lax.broadcasted_iota(jnp.int32, (TC, 1, 1), 0)
    valid = N - pl.program_id(0) * TC
    return jnp.where(ch < valid, d, 0.0)


def _store_partial(o_ref, s):
    # lane-dense (1, 8, 128) partial-sum block; the wrapper reads [:, 0, 0]
    o_ref[...] = jnp.broadcast_to(s.astype(jnp.float32), (1, 8, 128))


def _make_l1_kernel(TC, N, needs_mask):
    def kernel(x_ref, y_ref, o_ref):
        d = x_ref[...].astype(jnp.float32) - y_ref[...].astype(jnp.float32)
        d = _channel_mask(d, TC, N, needs_mask)
        _store_partial(o_ref, jnp.sum(jnp.abs(d)))
    return kernel, []


def _make_blur_kernel(weights, H, W, TC, N, needs_mask, use_mxu):
    K = len(weights)
    r = K // 2
    half = K // 2
    w = [float(v) for v in weights]
    symmetric = all(w[i] == w[K - 1 - i] for i in range(K))
    pad_top = _round_up(r, 8)          # sublane-aligned interior placement
    Hp_s = pad_top + H + r
    base = pad_top - r

    if use_mxu:
        # scratch padded along H only; horizontal pass runs on the (idle) MXU
        def kernel(x_ref, y_ref, mh_ref, o_ref, pad_ref):
            d = x_ref[...].astype(jnp.float32) - y_ref[...].astype(jnp.float32)
            d = _channel_mask(d, TC, N, needs_mask)

            # TODO(synk): padding mode of `filters.filtering` unknown; zero-pad used.
            pad_ref[:, 0:pad_top, :] = jnp.zeros((TC, pad_top, W), jnp.float32)
            pad_ref[:, pad_top + H:Hp_s, :] = jnp.zeros((TC, r, W), jnp.float32)
            pad_ref[:, pad_top:pad_top + H, :] = d

            def vtap(dy):
                return pad_ref[:, base + dy:base + dy + H, :]

            # vertical pass (VPU); Gaussian symmetry folds the tap count ~in half
            if symmetric:
                if K % 2 == 1:
                    acc = w[half] * vtap(half)
                else:
                    acc = jnp.zeros((TC, H, W), jnp.float32)
                for dy in range(half):
                    acc = acc + w[dy] * (vtap(dy) + vtap(K - 1 - dy))
            else:
                acc = w[0] * vtap(0)
                for dy in range(1, K):
                    acc = acc + w[dy] * vtap(dy)

            # horizontal pass as a banded matmul on the MXU
            out2 = jnp.dot(acc.reshape(TC * H, W), mh_ref[...],
                           preferred_element_type=jnp.float32,
                           precision=lax.Precision.HIGHEST)
            _store_partial(o_ref, jnp.sum(jnp.abs(out2)))

        scratch = [pltpu.VMEM((TC, Hp_s, W), jnp.float32)]
        return kernel, scratch, True

    # pure-VPU fallback (any H; also used if the MXU path fails to lower)
    Wp_s = W + 2 * r

    def kernel(x_ref, y_ref, o_ref, pad_ref):
        d = x_ref[...].astype(jnp.float32) - y_ref[...].astype(jnp.float32)
        d = _channel_mask(d, TC, N, needs_mask)

        pad_ref[:, 0:pad_top, :] = jnp.zeros((TC, pad_top, Wp_s), jnp.float32)
        pad_ref[:, pad_top + H:Hp_s, :] = jnp.zeros((TC, r, Wp_s), jnp.float32)
        pad_ref[:, pad_top:pad_top + H, 0:r] = jnp.zeros((TC, H, r), jnp.float32)
        pad_ref[:, pad_top:pad_top + H, r + W:Wp_s] = jnp.zeros((TC, H, r), jnp.float32)
        pad_ref[:, pad_top:pad_top + H, r:r + W] = d

        def vtap(dy):
            return pad_ref[:, base + dy:base + dy + H, :]

        if symmetric:
            if K % 2 == 1:
                acc = w[half] * vtap(half)
            else:
                acc = jnp.zeros((TC, H, Wp_s), jnp.float32)
            for dy in range(half):
                acc = acc + w[dy] * (vtap(dy) + vtap(K - 1 - dy))

            if K % 2 == 1:
                out = w[half] * acc[:, :, half:half + W]
            else:
                out = jnp.zeros((TC, H, W), jnp.float32)
            for dx in range(half):
                out = out + w[dx] * (acc[:, :, dx:dx + W]
                                     + acc[:, :, K - 1 - dx:K - 1 - dx + W])
        else:
            acc = w[0] * vtap(0)
            for dy in range(1, K):
                acc = acc + w[dy] * vtap(dy)
            out = w[0] * acc[:, :, 0:W]
            for dx in range(1, K):
                out = out + w[dx] * acc[:, :, dx:dx + W]

        _store_partial(o_ref, jnp.sum(jnp.abs(out)))

    scratch = [pltpu.VMEM((TC, Hp_s, Wp_s), jnp.float32)]
    return kernel, scratch, False


class Distance:
    """JAX/Pallas port of the PyTorch `Distance` module (forward pass)."""

    def __init__(self, name: str) -> None:
        parse = name.split('-')
        if len(parse) == 1:
            self.weights = np.array([1.0], dtype=np.float32)   # no filtering
        else:
            sigma = int(parse[1]) / 10
            print(sigma)
            self.weights = gaussian_kernel_1d(sigma)

    def __call__(self, x: jax.Array, y: jax.Array) -> jax.Array:
        assert x.shape == y.shape and x.ndim == 4
        B, C, H, W = x.shape
        N = B * C
        K = len(self.weights)
        r = K // 2
        dsize = jnp.dtype(x.dtype).itemsize

        # native (N, H, W) view: free reshape, no HBM transpose/copy in the wrapper
        x3 = x.reshape(N, H, W)
        y3 = y.reshape(N, H, W)

        # ---- channels-per-step block sizing from the queried VMEM capacity ----
        vmem_cap = _vmem_capacity_bytes()
        budget = max(12 * 1024 * 1024, vmem_cap // 4)   # ~16 MiB v7x, ~32 MiB v5e/v6e
        vmem_limit = int(vmem_cap * 0.85)

        pad_top = _round_up(r, 8) if r > 0 else 0
        W_t = _round_up(W, 128)
        H_t = _round_up(H, 8)
        if K > 1:
            Ws_t = _round_up(W + 2 * r, 128)
            Hp_t = _round_up(pad_top + H + r, 8)
            per_chan = (4 * H_t * W_t * dsize                  # x & y, double-buffered
                        + 4 * (Hp_t * Ws_t + 3 * H_t * W_t))   # pad scratch + f32 temps
            fixed = 2 * W_t * W_t * 4                          # banded matrix
        else:
            per_chan = 4 * H_t * W_t * dsize + 8 * H_t * W_t
            fixed = 0
        max_tc = max(1, (budget - fixed) // per_chan)
        # TODO(synk): very large per-channel images (e.g. 1024x1024 on v7x's 64 MiB
        # VMEM) would need an H-tiled path with halo DMAs; only channel tiling here.

        TC = int(min(N, max_tc, 1024))
        if TC == N and N >= 2:
            TC = (N + 1) // 2      # >= 2 grid steps so both v7x TensorCores get work
        if N % TC != 0:
            best = max(d for d in range(1, TC + 1) if N % d == 0)
            if 2 * best >= TC:     # prefer an exact divisor when it is close enough
                TC = best
        TC = max(1, TC)
        G = pl.cdiv(N, TC)
        needs_mask = (N % TC) != 0

        blk = pl.BlockSpec((TC, H, W), lambda i: (i, 0, 0))
        out_spec = pl.BlockSpec((1, 8, 128), lambda i: (i, 0, 0))
        cparams = pltpu.CompilerParams(dimension_semantics=("parallel",),
                                       vmem_limit_bytes=vmem_limit)

        def launch(kernel, scratch, in_specs, args):
            return pl.pallas_call(
                kernel,
                out_shape=jax.ShapeDtypeStruct((G, 8, 128), jnp.float32),
                grid=(G,),
                in_specs=in_specs,
                out_specs=out_spec,
                scratch_shapes=scratch,
                compiler_params=cparams,
            )(*args)

        if K == 1:
            kernel, scratch = _make_l1_kernel(TC, N, needs_mask)
            partials = launch(kernel, scratch, [blk, blk], (x3, y3))
        else:
            def run(use_mxu):
                kernel, scratch, takes_matrix = _make_blur_kernel(
                    self.weights, H, W, TC, N, needs_mask, use_mxu)
                in_specs = [blk, blk]
                args = [x3, y3]
                if takes_matrix:
                    in_specs.append(pl.BlockSpec((W, W), lambda i: (0, 0)))
                    args.append(jnp.asarray(_band_matrix(self.weights, W)))
                return launch(kernel, scratch, in_specs, tuple(args))

            if H % 8 == 0:
                try:
                    partials = jax.block_until_ready(run(True))
                except Exception:
                    # MXU band-matmul path unavailable; use the VPU tap path
                    partials = run(False)
            else:
                partials = run(False)

        total = jnp.sum(partials[:, 0, 0])
        return (total / (B * C * H * W)).astype(x.dtype)


def _ref_loss(x, y, weights):
    # plain-JAX reference (same zero-pad separable blur + mean L1)
    weights = [float(v) for v in weights]
    K = len(weights)
    r = K // 2
    H, W = x.shape[2], x.shape[3]

    def blur(a):
        if K == 1:
            return weights[0] * a
        ap = jnp.pad(a, ((0, 0), (0, 0), (r, r), (r, r)))
        tmp = sum(weights[d] * ap[:, :, :, d:d + W] for d in range(K))
        out = sum(weights[d] * tmp[:, :, d:d + H, :] for d in range(K))
        return out

    return jnp.mean(jnp.abs(blur(x) - blur(y)))


if __name__ == "__main__":
    key = jax.random.PRNGKey(0)
    kx, ky = jax.random.split(key)
    B, C, H, W = 2, 4, 16, 16
    x = jax.random.normal(kx, (B, C, H, W), dtype=jnp.float32)
    y = jax.random.normal(ky, (B, C, H, W), dtype=jnp.float32)

    # case 1: plain L1 (name without '-')
    dist_plain = Distance("l1")
    out_plain = jax.block_until_ready(dist_plain(x, y))
    ref_plain = _ref_loss(x, y, dist_plain.weights)
    assert np.allclose(np.asarray(out_plain), np.asarray(ref_plain),
                       rtol=1e-5, atol=1e-5), (out_plain, ref_plain)

    # case 2: Gaussian-filtered L1 (sigma = 15 / 10 = 1.5)
    # (slightly looser tolerance: headroom for MXU f32 rounding in the band matmul)
    dist_blur = Distance("l1-15")
    out_blur = jax.block_until_ready(dist_blur(x, y))
    ref_blur = _ref_loss(x, y, dist_blur.weights)
    assert np.allclose(np.asarray(out_blur), np.asarray(ref_blur),
                       rtol=1e-4, atol=1e-4), (out_blur, ref_blur)

    print("KERNEL_OK")
</pallas_src>

<mosaic_0001>
module attributes {stable_mosaic.version = 11 : i64} {
  func.func @kernel(%arg0: i32, %arg1: memref<4x16x16xf32, #tpu.memory_space<vmem>>, %arg2: memref<4x16x16xf32, #tpu.memory_space<vmem>>, %arg3: memref<1x8x128xf32, #tpu.memory_space<vmem>>) attributes {dimension_semantics = [#tpu.dimension_semantics<parallel>], iteration_bounds = array<i64: 2>, scalar_prefetch = 0 : i64, scratch_operands = 0 : i64, tpu.core_type = #tpu.core_type<tc>, window_params = [{transform_indices = @transform_0, window_bounds = array<i64: 4, 16, 16>}, {transform_indices = @transform_1, window_bounds = array<i64: 4, 16, 16>}, {transform_indices = @transform_2, window_bounds = array<i64: 1, 8, 128>}]} {
    %c0 = arith.constant 0 : index
    %c0_0 = arith.constant 0 : index
    %c0_1 = arith.constant 0 : index
    %0 = vector.load %arg1[%c0, %c0_0, %c0_1] : memref<4x16x16xf32, #tpu.memory_space<vmem>>, vector<4x16x16xf32>
    %c0_2 = arith.constant 0 : index
    %c0_3 = arith.constant 0 : index
    %c0_4 = arith.constant 0 : index
    %1 = vector.load %arg2[%c0_2, %c0_3, %c0_4] : memref<4x16x16xf32, #tpu.memory_space<vmem>>, vector<4x16x16xf32>
    %2 = arith.subf %0, %1 : vector<4x16x16xf32>
    %3 = math.absf %2 : vector<4x16x16xf32>
    %4 = vector.shape_cast %3 : vector<4x16x16xf32> to vector<1x4x16x16xf32>
    %cst = arith.constant dense<0.000000e+00> : vector<1xf32>
    %5 = vector.multi_reduction <add>, %4, %cst [1, 2, 3] : vector<1x4x16x16xf32> to vector<1xf32>
    %6 = vector.shape_cast %5 : vector<1xf32> to vector<1x1x1x1xf32>
    %7 = vector.extract %6[0, 0, 0, 0] : f32 from vector<1x1x1x1xf32>
    %8 = vector.broadcast %7 : f32 to vector<1x8x128xf32>
    %c0_5 = arith.constant 0 : index
    %c0_6 = arith.constant 0 : index
    %c0_7 = arith.constant 0 : index
    %9 = vector.load %arg3[%c0_5, %c0_6, %c0_7] : memref<1x8x128xf32, #tpu.memory_space<vmem>>, vector<1x8x128xf32>
    tpu.vector_store %arg3[%c0_5, %c0_6, %c0_7], %8 {strides = array<i32>} : memref<1x8x128xf32, #tpu.memory_space<vmem>>, vector<1x8x128xf32>,
    return
  }
  func.func @transform_0(%arg0: i32) -> (i32, i32, i32) {
    %c0_i32 = arith.constant 0 : i32
    %c0_i32_0 = arith.constant 0 : i32
    %c0_i32_1 = arith.constant 0 : i32
    return %arg0, %c0_i32, %c0_i32_0 : i32, i32, i32
  }
  func.func @transform_1(%arg0: i32) -> (i32, i32, i32) {
    %c0_i32 = arith.constant 0 : i32
    %c0_i32_0 = arith.constant 0 : i32
    %c0_i32_1 = arith.constant 0 : i32
    return %arg0, %c0_i32, %c0_i32_0 : i32, i32, i32
  }
  func.func @transform_2(%arg0: i32) -> (i32, i32, i32) {
    %c0_i32 = arith.constant 0 : i32
    %c0_i32_0 = arith.constant 0 : i32
    %c0_i32_1 = arith.constant 0 : i32
    return %arg0, %c0_i32, %c0_i32_0 : i32, i32, i32
  }
}

</mosaic_0001>

<llo_original>
// kernel: tpu_custom_call.1
$region0: #{tpu_custom_call.1}
  #allocation0 [shape = 'u32[]', space=smem, size = 0x4, offset = 0x4, fixed_abs, tag = 'smem constant byte address 0x4 - core index']
  #allocation1 [shape = 'u32[144,128]{1,0:T(1,128)}', space=vmem, size = 0x12000, scoped, tag = 'internal scratch']
  %s0 = inlined_call_operand.hbm [shape: f32[8,16,16], index: 0, kind: input, shape index: {}]
  %s1 = inlined_call_operand.hbm [shape: f32[8,16,16], index: 1, kind: input, shape index: {}]
  %s2 = inlined_call_operand.hbm [shape: f32[2,8,128], index: 2, kind: output, shape index: {}]
  %s3 = sld [smem:[#allocation0]]
  $region49: #{tpu_custom_call.1} parent=0
    _
  %s5 = ssub.s32 1, %s3
  %s6 = scalar_select 0, %s5, %s3
  $region1: #{tpu_custom_call.1} parent=0
    #allocation2 [shape = 'u8[65536]{0}', space=vmem, size = 0x10000, scoped, tag = 'input window, operand 0']
    #allocation3 [shape = 's32[2]{0}', space=sflag, size = 0x8, scoped, tag = 'scoped memory for tpu_custom_call.1']
    #allocation4 [shape = 's32[2]{0}', space=sflag, size = 0x8, scoped, tag = 'scoped memory for tpu_custom_call.1']
    #allocation5 [shape = 'u8[65536]{0}', space=vmem, size = 0x10000, scoped, tag = 'input window, operand 1']
    #allocation6 [shape = 's32[2]{0}', space=sflag, size = 0x8, scoped, tag = 'scoped memory for tpu_custom_call.1']
    #allocation7 [shape = 'u8[8192]{0}', space=vmem, size = 0x2000, scoped, tag = 'output window, operand 0']
    %7 = vsyncpa [#allocation3], 0
    %s8 = scalar_lea.sflag [#allocation3], 1
    %9 = vsyncpa %s8, 0
    %10 = vsyncpa [#allocation6], 0
    %s11 = scalar_lea.sflag [#allocation6], 1
    %12 = vsyncpa %s11, 0
    %13 = vsyncpa [#allocation4], 0
    %s14 = scalar_lea.sflag [#allocation4], 1
    %15 = vsyncpa %s14, 0
    loop: start=0, step=1, limit=4
    $region2: #{tpu_custom_call.1} parent=1 // loop_pre_header
      _
    $region3: #{tpu_custom_call.1} parent=1 // loop_header
      %s17 = sphi 0, %s21
      %p18 = scmp.ge.s32.totalorder %s17, 4
      %s27 = sphi 0, %s29
      %s30 = sphi 0, %s27
      %s31 = sphi 0, %s30
      %s47 = sphi 0, %s31
      %s53 = sphi 0, %s55
      %s56 = sphi 0, %s53
      %s57 = sphi 0, %s56
      %s73 = sphi 0, %s57
      %s79 = sphi 0, %s81
      %s82 = sphi 0, %s79
      %s83 = sphi 0, %s82
      %s99 = sphi 0, %s83
    $region4: #{tpu_custom_call.1} parent=1 // loop_header_branch
      %20 = sbr.rel (%p18) target = $region8
    $region5: #{tpu_custom_call.1} parent=1 // loop_body
      %s22 = ssub.s32 %s17, 1
      %s23 = ssub.s32 %s17, 2
      %s24 = sadd.s32 %s17, 1
      %s25 = ssub.s32 %s17, %s24
      %p26 = scmp.eq.s32.totalorder %s25, 0
      %s28 = sadd.s32 %s27, 1
      %s29 = scalar_select %p26, %s27, %s28
      %p32 = pneg %p26
      %p33 = scmp.eq.s32.totalorder %s17, 1
      %p34 = por %p32, %p33
      %p35 = scmp.ne.s32.totalorder %s27, %s30
      %p36 = scmp.eq.s32.totalorder %s17, 0
      %p37 = por %p35, %p36
      %p38 = scmp.ne.s32.totalorder %s27, %s30
      %p39 = scmp.eq.s32.totalorder %s22, 1
      %p40 = por %p38, %p39
      %p41 = scmp.ne.s32.totalorder %s30, %s31
      %p42 = scmp.eq.s32.totalorder %s22, 0
      %p43 = por %p41, %p42
      %p44 = scmp.ne.s32.totalorder %s30, %s31
      %p45 = scmp.eq.s32.totalorder %s23, 1
      %p46 = por %p44, %p45
      %p48 = scmp.ne.s32.totalorder %s31, %s47
      %p49 = scmp.eq.s32.totalorder %s23, 0
      %p50 = por %p48, %p49
      %s51 = ssub.s32 %s17, %s24
      %p52 = scmp.eq.s32.totalorder %s51, 0
      %s54 = sadd.s32 %s53, 1
      %s55 = scalar_select %p52, %s53, %s54
      %p58 = pneg %p52
      %p59 = scmp.eq.s32.totalorder %s17, 1
      %p60 = por %p58, %p59
      %p61 = scmp.ne.s32.totalorder %s53, %s56
      %p62 = scmp.eq.s32.totalorder %s17, 0
      %p63 = por %p61, %p62
      %p64 = scmp.ne.s32.totalorder %s53, %s56
      %p65 = scmp.eq.s32.totalorder %s22, 1
      %p66 = por %p64, %p65
      %p67 = scmp.ne.s32.totalorder %s56, %s57
      %p68 = scmp.eq.s32.totalorder %s22, 0
      %p69 = por %p67, %p68
      %p70 = scmp.ne.s32.totalorder %s56, %s57
      %p71 = scmp.eq.s32.totalorder %s23, 1
      %p72 = por %p70, %p71
      %p74 = scmp.ne.s32.totalorder %s57, %s73
      %p75 = scmp.eq.s32.totalorder %s23, 0
      %p76 = por %p74, %p75
      %s77 = ssub.s32 %s17, %s24
      %p78 = scmp.eq.s32.totalorder %s77, 0
      %s80 = sadd.s32 %s79, 1
      %s81 = scalar_select %p78, %s79, %s80
      %p84 = pneg %p78
      %p85 = scmp.eq.s32.totalorder %s17, 1
      %p86 = por %p84, %p85
      %p87 = scmp.ne.s32.totalorder %s79, %s82
      %p88 = scmp.eq.s32.totalorder %s17, 0
      %p89 = por %p87, %p88
      %p90 = scmp.ne.s32.totalorder %s79, %s82
      %p91 = scmp.eq.s32.totalorder %s22, 1
      %p92 = por %p90, %p91
      %p93 = scmp.ne.s32.totalorder %s82, %s83
      %p94 = scmp.eq.s32.totalorder %s22, 0
      %p95 = por %p93, %p94
      %p96 = scmp.ne.s32.totalorder %s82, %s83
      %p97 = scmp.eq.s32.totalorder %s23, 1
      %p98 = por %p96, %p97
      %p100 = scmp.ne.s32.totalorder %s83, %s99
      %p101 = scmp.eq.s32.totalorder %s23, 0
      %p102 = por %p100, %p101
      %p103 = scmp.le.s32.totalorder 1, %s17
      %p104 = scmp.lt.s32.totalorder %s17, 3
      %p105 = pnand %p103, %p104
      %p106 = pneg %p105
      // Predicated region
      $region9: #{tpu_custom_call.1} parent=5 // pred_check
        _
      $region10: #{tpu_custom_call.1} parent=5 // pred_check_branch
        %108 = sbr.rel (%p105) target = $region12
      $region11: #{tpu_custom_call.1} parent=5 // pred_region
        %s109 = ssub.s32 %s17, 1
      $region12: #{tpu_custom_call.1} parent=5 // pred_fallthru
        _
      %p110 = scmp.lt.s32.totalorder %s17, 2
      // Predicated region
      $region13: #{tpu_custom_call.1} parent=5 // pred_check
        %p111 = pneg %p110
      $region14: #{tpu_custom_call.1} parent=5 // pred_check_branch
        %113 = sbr.rel (%p111) target = $region16
      $region15: #{tpu_custom_call.1} parent=5 // pred_region
        // Predicated region
        $region17: #{tpu_custom_call.1} parent=15 // pred_check
          %p114 = pneg %p37
        $region18: #{tpu_custom_call.1} parent=15 // pred_check_branch
          %116 = sbr.rel (%p114) target = $region20
        $region19: #{tpu_custom_call.1} parent=15 // pred_region
          %s117 = sand.u32 %s27, 1
          %s118 = scalar_lea.sflag [#allocation3], %s117
          %s119 = sand.u32 %s27, 1
          %s120 = smul.addr %s119, 64
          %s121 = scalar_lea.vmem [#allocation2], %s120
          %s122 = smul.u32 4, %s17
          %s124 = ssub.s32 1024, 1024
          %125 = vsyncadd %s118, %s124
          %s126 = smul.addr %s122, 2
          %s127 = smul.addr %s126, 128
          %s128 = scalar_lea.hbm %s0, %s127
          %s129 = sshll.u32 %s121, 4
          %s130 = int_to_ptr.vmem [resolvable:$true] %s129
          %135 = dma.hbm_to_vmem [thread:$0]  %s128, 1024, %s130, %s118, 128, 128, 8
        $region20: #{tpu_custom_call.1} parent=15 // pred_fallthru
          _
        // Predicated region
        $region21: #{tpu_custom_call.1} parent=15 // pred_check
          %p136 = pneg %p63
        $region22: #{tpu_custom_call.1} parent=15 // pred_check_branch
          %138 = sbr.rel (%p136) target = $region24
        $region23: #{tpu_custom_call.1} parent=15 // pred_region
          %s139 = sand.u32 %s53, 1
          %s140 = scalar_lea.sflag [#allocation6], %s139
          %s141 = sand.u32 %s53, 1
          %s142 = smul.addr %s141, 64
          %s143 = scalar_lea.vmem [#allocation5], %s142
          %s144 = smul.u32 4, %s17
          %s146 = ssub.s32 1024, 1024
          %147 = vsyncadd %s140, %s146
          %s148 = smul.addr %s144, 2
          %s149 = smul.addr %s148, 128
          %s150 = scalar_lea.hbm %s1, %s149
          %s151 = sshll.u32 %s143, 4
          %s152 = int_to_ptr.vmem [resolvable:$true] %s151
          %157 = dma.hbm_to_vmem [thread:$0]  %s150, 1024, %s152, %s140, 128, 128, 8
        $region24: #{tpu_custom_call.1} parent=15 // pred_fallthru
          _
      $region16: #{tpu_custom_call.1} parent=5 // pred_fallthru
        _
      %p158 = scmp.le.s32.totalorder 1, %s17
      %p159 = scmp.lt.s32.totalorder %s17, 3
      %p160 = pnand %p158, %p159
      %p161 = pneg %p160
      // Predicated region
      $region25: #{tpu_custom_call.1} parent=5 // pred_check
        _
      $region26: #{tpu_custom_call.1} parent=5 // pred_check_branch
        %163 = sbr.rel (%p160) target = $region28
      $region27: #{tpu_custom_call.1} parent=5 // pred_region
        %s164 = ssub.s32 %s17, 1
        %s165 = sand.u32 %s30, 1
        %s166 = scalar_lea.sflag [#allocation3], %s165
        %s167 = sand.u32 %s30, 1
        %s168 = smul.addr %s167, 64
        %s169 = scalar_lea.vmem [#allocation2], %s168
        // Predicated region
        $region29: #{tpu_custom_call.1} parent=27 // pred_check
          %p170 = pneg %p43
        $region30: #{tpu_custom_call.1} parent=27 // pred_check_branch
          %172 = sbr.rel (%p170) target = $region32
        $region31: #{tpu_custom_call.1} parent=27 // pred_region
          %173 = dma.done %s166, 1024
        $region32: #{tpu_custom_call.1} parent=27 // pred_fallthru
          _
        %s174 = sand.u32 %s56, 1
        %s175 = scalar_lea.sflag [#allocation6], %s174
        %s176 = sand.u32 %s56, 1
        %s177 = smul.addr %s176, 64
        %s178 = scalar_lea.vmem [#allocation5], %s177
        // Predicated region
        $region33: #{tpu_custom_call.1} parent=27 // pred_check
          %p179 = pneg %p69
        $region34: #{tpu_custom_call.1} parent=27 // pred_check_branch
          %181 = sbr.rel (%p179) target = $region36
        $region35: #{tpu_custom_call.1} parent=27 // pred_region
          %182 = dma.done %s175, 1024
        $region36: #{tpu_custom_call.1} parent=27 // pred_fallthru
          _
        %s183 = sand.u32 %s30, 1
        %s184 = scalar_lea.sflag [#allocation3], %s183
        %s185 = sand.u32 %s30, 1
        %s186 = smul.addr %s185, 64
        %s187 = scalar_lea.vmem [#allocation2], %s186
        %p188 = pneg %p43
        %p189 = pneg %p40
        %s190 = sand.u32 %s56, 1
        %s191 = scalar_lea.sflag [#allocation6], %s190
        %s192 = sand.u32 %s56, 1
        %s193 = smul.addr %s192, 64
        %s194 = scalar_lea.vmem [#allocation5], %s193
        %p195 = pneg %p69
        %p196 = pneg %p66
        %p197 = pneg %p95
        %p198 = pneg %p92
        %s199 = sand.u32 %s82, 1
        %s200 = scalar_lea.sflag [#allocation4], %s199
        %s201 = sand.u32 %s82, 1
        %s202 = smul.addr %s201, 8
        %s203 = scalar_lea.vmem [#allocation7], %s202
        %s204 = smul.u32 4, %s22
        %s205 = smul.u32 4, %s22
        %v206 = vld [vmem:[%s169] sm:$0xff]
        %v207 = vld [vmem:[%s169 + $0x8] sm:$0xff]
        %v208 = vld [vmem:[%s169 + $0x10] sm:$0xff]
        %v209 = vld [vmem:[%s169 + $0x18] sm:$0xff]
        %v210 = vld [vmem:[%s169 + $0x20] sm:$0xff]
        %v211 = vld [vmem:[%s169 + $0x28] sm:$0xff]
        %v212 = vld [vmem:[%s169 + $0x30] sm:$0xff]
        %v213 = vld [vmem:[%s169 + $0x38] sm:$0xff]
        %v214 = vld [vmem:[%s178] sm:$0xff]
        %v215 = vld [vmem:[%s178 + $0x8] sm:$0xff]
        %v216 = vld [vmem:[%s178 + $0x10] sm:$0xff]
        %v217 = vld [vmem:[%s178 + $0x18] sm:$0xff]
        %v218 = vld [vmem:[%s178 + $0x20] sm:$0xff]
        %v219 = vld [vmem:[%s178 + $0x28] sm:$0xff]
        %v220 = vld [vmem:[%s178 + $0x30] sm:$0xff]
        %v221 = vld [vmem:[%s178 + $0x38] sm:$0xff]
        %v222 = vsub.f32 %v206, %v214
        %v223 = vsub.f32 %v207, %v215
        %v224 = vsub.f32 %v208, %v216
        %v225 = vsub.f32 %v209, %v217
        %v226 = vsub.f32 %v210, %v218
        %v227 = vsub.f32 %v211, %v219
        %v228 = vsub.f32 %v212, %v220
        %v229 = vsub.f32 %v213, %v221
        %v230 = vand.u32 2147483647, %v222
        %v231 = vand.u32 2147483647, %v223
        %v232 = vand.u32 2147483647, %v224
        %v233 = vand.u32 2147483647, %v225
        %v234 = vand.u32 2147483647, %v226
        %v235 = vand.u32 2147483647, %v227
        %v236 = vand.u32 2147483647, %v228
        %v237 = vand.u32 2147483647, %v229
        %vm238 = vcmask 130048
        %v239 = vsel %vm238, %v230, 0.0
        %v240 = vsel %vm238, %v231, 0.0
        %v241 = vadd.f32 %v239, %v240
        %v242 = vsel %vm238, %v232, 0.0
        %v243 = vadd.f32 %v241, %v242
        %v244 = vsel %vm238, %v233, 0.0
        %v245 = vadd.f32 %v243, %v244
        %v246 = vsel %vm238, %v234, 0.0
        %v247 = vadd.f32 %v245, %v246
        %v248 = vsel %vm238, %v235, 0.0
        %v249 = vadd.f32 %v247, %v248
        %v250 = vsel %vm238, %v236, 0.0
        %v251 = vadd.f32 %v249, %v250
        %v252 = vsel %vm238, %v237, 0.0
        %v253 = vadd.f32 %v251, %v252
        %254 = vadd.xlane.f32.xlu0 %v253
        %v255 = vpop.xlane.xlu0 %254
        %v256 = vrot.slane %v255, 4
        %v257 = vadd.f32 %v255, %v256
        %v258 = vrot.slane %v257, 2
        %v259 = vadd.f32 %v257, %v258
        %v260 = vrot.slane %v259, 1
        %v261 = vadd.f32 %v259, %v260
        %s262 = vtos %v261
        %v263 = vstv %s262
        %264 = vst [vmem:[%s203] sm:$0xff] %v263
        %s265 = sand.u32 %s82, 1
        %s266 = scalar_lea.sflag [#allocation4], %s265
        %s267 = sand.u32 %s82, 1
        %s268 = smul.addr %s267, 8
        %s269 = scalar_lea.vmem [#allocation7], %s268
        // Predicated region
        $region37: #{tpu_custom_call.1} parent=27 // pred_check
          %p270 = pneg %p92
        $region38: #{tpu_custom_call.1} parent=27 // pred_check_branch
          %272 = sbr.rel (%p270) target = $region40
        $region39: #{tpu_custom_call.1} parent=27 // pred_region
          %s274 = ssub.s32 128, 128
          %275 = vsyncadd %s266, %s274
          %s276 = smul.addr %s22, 128
          %s277 = scalar_lea.hbm %s2, %s276
          %s279 = sshll.u32 %s269, 4
          %s280 = int_to_ptr.vmem [resolvable:$true] %s279
          %282 = dma.vmem_to_hbm [thread:$0]  %s280, 128, %s277, %s266
        $region40: #{tpu_custom_call.1} parent=27 // pred_fallthru
          _
      $region28: #{tpu_custom_call.1} parent=5 // pred_fallthru
        _
      %p283 = scmp.le.s32.totalorder 2, %s17
      // Predicated region
      $region41: #{tpu_custom_call.1} parent=5 // pred_check
        %p284 = pneg %p283
      $region42: #{tpu_custom_call.1} parent=5 // pred_check_branch
        %286 = sbr.rel (%p284) target = $region44
      $region43: #{tpu_custom_call.1} parent=5 // pred_region
        %s287 = ssub.s32 %s17, 2
        // Predicated region
        $region45: #{tpu_custom_call.1} parent=43 // pred_check
          %p288 = pneg %p98
        $region46: #{tpu_custom_call.1} parent=43 // pred_check_branch
          %290 = sbr.rel (%p288) target = $region48
        $region47: #{tpu_custom_call.1} parent=43 // pred_region
          %s291 = sand.u32 %s83, 1
          %s292 = scalar_lea.sflag [#allocation4], %s291
          %s293 = sand.u32 %s83, 1
          %s294 = smul.addr %s293, 8
          %s295 = scalar_lea.vmem [#allocation7], %s294
          %296 = dma.done %s292, 128
        $region48: #{tpu_custom_call.1} parent=43 // pred_fallthru
          _
      $region44: #{tpu_custom_call.1} parent=5 // pred_fallthru
        _
    $region6: #{tpu_custom_call.1} parent=1 // loop_footer
      %s21 = sadd.s32 1, %s17
    $region7: #{tpu_custom_call.1} parent=1 // loop_footer_branch
      %16 = sbr.rel target = $region3
    $region8: #{tpu_custom_call.1} parent=1 // loop_exit
      _
    %297 = vsyncpa [#allocation3], 1
    %s298 = scalar_lea.sflag [#allocation3], 1
    %299 = vsyncpa %s298, 1
    %300 = vsyncpa [#allocation6], 1
    %s301 = scalar_lea.sflag [#allocation6], 1
    %302 = vsyncpa %s301, 1
    %303 = vsyncpa [#allocation4], 1
    %s304 = scalar_lea.sflag [#allocation4], 1
    %305 = vsyncpa %s304, 1

</llo_original>
